<compile_context>
chip_gen: v5e
topology: v5e:2x2
jax: 0.10.0
libtpu: 0.0.40
codegen_flags: <defaults>
</compile_context>

<pallas_src>
import functools

import jax
import jax.numpy as jnp
import numpy as np
from jax.experimental import pallas as pl
from jax.experimental.pallas import tpu as pltpu


def _pair(v):
    if isinstance(v, (tuple, list)):
        return int(v[0]), int(v[1])
    return int(v), int(v)


# ----------------------------------------------------------------------------
# Pallas kernel: select-reduction over the K window-offset candidates.
#   Strict '>' means the earliest window position wins ties, matching
#   argmax-of-|z| first-occurrence tie breaking.  Uses |z|^2 (same argmax as
#   |z|, no sqrt -> pure VPU work, no EUP).
# ----------------------------------------------------------------------------
def _cmaxpool_select_kernel(cr_ref, ci_ref, yr_ref, yi_ref, *, num_candidates):
    best_r = cr_ref[0:1, :]
    best_i = ci_ref[0:1, :]
    best_m = best_r * best_r + best_i * best_i
    for k in range(1, num_candidates):          # tiny static unroll (kH*kW)
        r = cr_ref[k:k + 1, :]
        i = ci_ref[k:k + 1, :]
        m = r * r + i * i
        take = m > best_m
        best_r = jnp.where(take, r, best_r)
        best_i = jnp.where(take, i, best_i)
        best_m = jnp.where(take, m, best_m)
    yr_ref[...] = best_r
    yi_ref[...] = best_i


def complex_max_pool2d(xr, xi, kernel_size, stride=None, padding=0, dilation=1,
                       ceil_mode=False, return_indices=False):
    """complexMaxPool2d on an NCHW complex tensor given as (real, imag)."""
    if return_indices:
        # TODO(synk): return_indices=True (index extraction) not implemented.
        raise NotImplementedError("return_indices=True is not supported")
    if ceil_mode:
        # TODO(synk): ceil_mode=True (partial trailing windows) not implemented.
        raise NotImplementedError("ceil_mode=True is not supported")

    kH, kW = _pair(kernel_size)
    sH, sW = _pair(stride) if stride is not None else (kH, kW)
    pH, pW = _pair(padding)
    dH, dW = _pair(dilation)

    xr = xr.astype(jnp.float32)
    xi = xi.astype(jnp.float32)
    N, C, H, W = xr.shape
    if pH or pW:
        # Zero padding is value-equivalent to torch's -inf |.| padding: a padded
        # zero can only "win" a window whose real elements are all zero, and
        # then the output is 0 either way.
        pad = ((0, 0), (0, 0), (pH, pH), (pW, pW))
        xr = jnp.pad(xr, pad)
        xi = jnp.pad(xi, pad)
        H += 2 * pH
        W += 2 * pW

    Hout = (H - dH * (kH - 1) - 1) // sH + 1
    Wout = (W - dW * (kW - 1) - 1) // sW + 1

    # Wrapper-side layout plumbing: one strided slice per window offset,
    # flattened so the kernel sees a lane-dense (K, P) slab and emits
    # unmasked full-lane stores.  Row-major (ih, iw) order == torch's
    # flattened-window index order.
    cand_r, cand_i = [], []
    for ih in range(kH):
        for iw in range(kW):
            h0, w0 = ih * dH, iw * dW
            sl = (slice(None), slice(None),
                  slice(h0, h0 + sH * (Hout - 1) + 1, sH),
                  slice(w0, w0 + sW * (Wout - 1) + 1, sW))
            cand_r.append(xr[sl].reshape(1, -1))
            cand_i.append(xi[sl].reshape(1, -1))
    cr = jnp.concatenate(cand_r, axis=0)     # (K, P), P = N*C*Hout*Wout
    ci = jnp.concatenate(cand_i, axis=0)
    K, P = cr.shape

    # Single fused pallas_call, everything VMEM resident.  Tile the lane axis
    # only when P grows large; tiles are 128-lane aligned, grid axis is
    # "parallel" so v7x's two TensorCores split the work.
    tile_p = P if P <= 16384 else 16384
    grid = (pl.cdiv(P, tile_p),)

    kernel = functools.partial(_cmaxpool_select_kernel, num_candidates=K)
    yr, yi = pl.pallas_call(
        kernel,
        out_shape=(jax.ShapeDtypeStruct((1, P), jnp.float32),
                   jax.ShapeDtypeStruct((1, P), jnp.float32)),
        grid=grid,
        in_specs=[pl.BlockSpec((K, tile_p), lambda j: (0, j)),
                  pl.BlockSpec((K, tile_p), lambda j: (0, j))],
        out_specs=(pl.BlockSpec((1, tile_p), lambda j: (0, j)),
                   pl.BlockSpec((1, tile_p), lambda j: (0, j))),
        compiler_params=pltpu.CompilerParams(
            dimension_semantics=("parallel",)),
    )(cr, ci)

    return yr.reshape(N, C, Hout, Wout), yi.reshape(N, C, Hout, Wout)


# ----------------------------------------------------------------------------
# Module-level wrapper mirroring cMaxPool1d (whose forward delegates to
# complexMaxPool2d on the NCHW input, per the reference module).
# ----------------------------------------------------------------------------
class CMaxPool1d:
    def __init__(self, kernel_size, stride=None, padding=0, dilation=1,
                 return_indices=False, ceil_mode=False):
        self.kernel_size = kernel_size
        self.stride = stride
        self.padding = padding
        self.dilation = dilation
        self.return_indices = return_indices
        self.ceil_mode = ceil_mode

    def __call__(self, xr, xi):
        return complex_max_pool2d(xr, xi, self.kernel_size, stride=self.stride,
                                  padding=self.padding, dilation=self.dilation,
                                  ceil_mode=self.ceil_mode,
                                  return_indices=self.return_indices)


if __name__ == "__main__":
    key = jax.random.PRNGKey(0)
    kr, ki = jax.random.split(key)

    N, C, H, W = 2, 4, 16, 16
    kernel_size, stride = 2, 2

    xr = jax.random.normal(kr, (N, C, H, W), jnp.float32)
    xi = jax.random.normal(ki, (N, C, H, W), jnp.float32)

    pool = CMaxPool1d(kernel_size, stride=stride)
    yr, yi = pool(xr, xi)
    jax.block_until_ready((yr, yi))

    # Independent reference: per-window argmax of squared magnitude (numpy).
    z = np.asarray(xr) + 1j * np.asarray(xi)
    Hout = (H - kernel_size) // stride + 1
    Wout = (W - kernel_size) // stride + 1
    ref = np.zeros((N, C, Hout, Wout), dtype=np.complex64)
    for n in range(N):
        for c in range(C):
            for ho in range(Hout):
                for wo in range(Wout):
                    win = z[n, c,
                            ho * stride:ho * stride + kernel_size,
                            wo * stride:wo * stride + kernel_size].reshape(-1)
                    idx = int(np.argmax(win.real ** 2 + win.imag ** 2))
                    ref[n, c, ho, wo] = win[idx]

    assert np.allclose(np.asarray(yr), ref.real, atol=1e-6, rtol=1e-6)
    assert np.allclose(np.asarray(yi), ref.imag, atol=1e-6, rtol=1e-6)
    print("KERNEL_OK")
</pallas_src>

<mosaic_0001>
module attributes {stable_mosaic.version = 11 : i64} {
  func.func @_cmaxpool_select_kernel(%arg0: i32, %arg1: memref<4x512xf32, #tpu.memory_space<vmem>>, %arg2: memref<4x512xf32, #tpu.memory_space<vmem>>, %arg3: memref<1x512xf32, #tpu.memory_space<vmem>>, %arg4: memref<1x512xf32, #tpu.memory_space<vmem>>) attributes {dimension_semantics = [#tpu.dimension_semantics<parallel>], iteration_bounds = array<i64: 1>, scalar_prefetch = 0 : i64, scratch_operands = 0 : i64, tpu.core_type = #tpu.core_type<tc>, window_params = [{transform_indices = @transform_0, window_bounds = array<i64: 4, 512>}, {transform_indices = @transform_1, window_bounds = array<i64: 4, 512>}, {transform_indices = @transform_2, window_bounds = array<i64: 1, 512>}, {transform_indices = @transform_3, window_bounds = array<i64: 1, 512>}]} {
    %c0 = arith.constant 0 : index
    %c0_0 = arith.constant 0 : index
    %0 = vector.load %arg1[%c0, %c0_0] : memref<4x512xf32, #tpu.memory_space<vmem>>, vector<1x512xf32>
    %c0_1 = arith.constant 0 : index
    %c0_2 = arith.constant 0 : index
    %1 = vector.load %arg2[%c0_1, %c0_2] : memref<4x512xf32, #tpu.memory_space<vmem>>, vector<1x512xf32>
    %2 = arith.mulf %0, %0 : vector<1x512xf32>
    %3 = arith.mulf %1, %1 : vector<1x512xf32>
    %4 = arith.addf %2, %3 : vector<1x512xf32>
    %c1 = arith.constant 1 : index
    %c0_3 = arith.constant 0 : index
    %5 = vector.load %arg1[%c1, %c0_3] : memref<4x512xf32, #tpu.memory_space<vmem>>, vector<1x512xf32>
    %c1_4 = arith.constant 1 : index
    %c0_5 = arith.constant 0 : index
    %6 = vector.load %arg2[%c1_4, %c0_5] : memref<4x512xf32, #tpu.memory_space<vmem>>, vector<1x512xf32>
    %7 = arith.mulf %5, %5 : vector<1x512xf32>
    %8 = arith.mulf %6, %6 : vector<1x512xf32>
    %9 = arith.addf %7, %8 : vector<1x512xf32>
    %10 = arith.cmpf ogt, %9, %4 : vector<1x512xf32>
    %11 = arith.select %10, %5, %0 : vector<1x512xi1>, vector<1x512xf32>
    %12 = arith.select %10, %6, %1 : vector<1x512xi1>, vector<1x512xf32>
    %13 = arith.select %10, %9, %4 : vector<1x512xi1>, vector<1x512xf32>
    %c2 = arith.constant 2 : index
    %c0_6 = arith.constant 0 : index
    %14 = vector.load %arg1[%c2, %c0_6] : memref<4x512xf32, #tpu.memory_space<vmem>>, vector<1x512xf32>
    %c2_7 = arith.constant 2 : index
    %c0_8 = arith.constant 0 : index
    %15 = vector.load %arg2[%c2_7, %c0_8] : memref<4x512xf32, #tpu.memory_space<vmem>>, vector<1x512xf32>
    %16 = arith.mulf %14, %14 : vector<1x512xf32>
    %17 = arith.mulf %15, %15 : vector<1x512xf32>
    %18 = arith.addf %16, %17 : vector<1x512xf32>
    %19 = arith.cmpf ogt, %18, %13 : vector<1x512xf32>
    %20 = arith.select %19, %14, %11 : vector<1x512xi1>, vector<1x512xf32>
    %21 = arith.select %19, %15, %12 : vector<1x512xi1>, vector<1x512xf32>
    %22 = arith.select %19, %18, %13 : vector<1x512xi1>, vector<1x512xf32>
    %c3 = arith.constant 3 : index
    %c0_9 = arith.constant 0 : index
    %23 = vector.load %arg1[%c3, %c0_9] : memref<4x512xf32, #tpu.memory_space<vmem>>, vector<1x512xf32>
    %c3_10 = arith.constant 3 : index
    %c0_11 = arith.constant 0 : index
    %24 = vector.load %arg2[%c3_10, %c0_11] : memref<4x512xf32, #tpu.memory_space<vmem>>, vector<1x512xf32>
    %25 = arith.mulf %23, %23 : vector<1x512xf32>
    %26 = arith.mulf %24, %24 : vector<1x512xf32>
    %27 = arith.addf %25, %26 : vector<1x512xf32>
    %28 = arith.cmpf ogt, %27, %22 : vector<1x512xf32>
    %29 = arith.select %28, %23, %20 : vector<1x512xi1>, vector<1x512xf32>
    %30 = arith.select %28, %24, %21 : vector<1x512xi1>, vector<1x512xf32>
    %c0_12 = arith.constant 0 : index
    %c0_13 = arith.constant 0 : index
    %31 = vector.load %arg3[%c0_12, %c0_13] : memref<1x512xf32, #tpu.memory_space<vmem>>, vector<1x512xf32>
    tpu.vector_store %arg3[%c0_12, %c0_13], %29 {strides = array<i32>} : memref<1x512xf32, #tpu.memory_space<vmem>>, vector<1x512xf32>,
    %c0_14 = arith.constant 0 : index
    %c0_15 = arith.constant 0 : index
    %32 = vector.load %arg4[%c0_14, %c0_15] : memref<1x512xf32, #tpu.memory_space<vmem>>, vector<1x512xf32>
    tpu.vector_store %arg4[%c0_14, %c0_15], %30 {strides = array<i32>} : memref<1x512xf32, #tpu.memory_space<vmem>>, vector<1x512xf32>,
    return
  }
  func.func @transform_0(%arg0: i32) -> (i32, i32) {
    %c0_i32 = arith.constant 0 : i32
    %c0_i32_0 = arith.constant 0 : i32
    return %c0_i32, %arg0 : i32, i32
  }
  func.func @transform_1(%arg0: i32) -> (i32, i32) {
    %c0_i32 = arith.constant 0 : i32
    %c0_i32_0 = arith.constant 0 : i32
    return %c0_i32, %arg0 : i32, i32
  }
  func.func @transform_2(%arg0: i32) -> (i32, i32) {
    %c0_i32 = arith.constant 0 : i32
    %c0_i32_0 = arith.constant 0 : i32
    return %c0_i32, %arg0 : i32, i32
  }
  func.func @transform_3(%arg0: i32) -> (i32, i32) {
    %c0_i32 = arith.constant 0 : i32
    %c0_i32_0 = arith.constant 0 : i32
    return %c0_i32, %arg0 : i32, i32
  }
}

</mosaic_0001>

<llo_original>
// kernel: tpu_custom_call.1
$region0: #{tpu_custom_call.1}
  #allocation0 [shape = 'u32[]', space=smem, size = 0x4, offset = 0x4, fixed_abs, tag = 'smem constant byte address 0x4 - core index']
  #allocation1 [shape = 'u32[72,128]{1,0:T(1,128)}', space=vmem, size = 0x9000, scoped, tag = 'internal scratch']
  %s0 = inlined_call_operand.hbm [shape: f32[4,512], index: 0, kind: input, shape index: {}]
  %s1 = inlined_call_operand.hbm [shape: f32[4,512], index: 1, kind: input, shape index: {}]
  %s2 = inlined_call_operand.hbm [shape: f32[1,512], index: 2, kind: output, shape index: {0}]
  %s3 = inlined_call_operand.hbm [shape: f32[1,512], index: 3, kind: output, shape index: {1}]
  %4 = xla_tuple %s2, %s3
  %s5 = sld [smem:[#allocation0]]
  $region34: #{tpu_custom_call.1} parent=0
    _
  %s7 = ssub.s32 1, %s5
  %s8 = scalar_select 0, %s7, %s5
  $region1: #{tpu_custom_call.1} parent=0
    #allocation2 [shape = 'u8[8192]{0}', space=vmem, size = 0x2000, scoped, tag = 'input window, operand 0, single buffered']
    #allocation3 [shape = 's32[1]{0}', space=sflag, size = 0x4, scoped, tag = 'scoped memory for tpu_custom_call.1']
    #allocation4 [shape = 's32[1]{0}', space=sflag, size = 0x4, scoped, tag = 'scoped memory for tpu_custom_call.1']
    #allocation5 [shape = 'u8[8192]{0}', space=vmem, size = 0x2000, scoped, tag = 'input window, operand 1, single buffered']
    #allocation6 [shape = 's32[1]{0}', space=sflag, size = 0x4, scoped, tag = 'scoped memory for tpu_custom_call.1']
    #allocation7 [shape = 'u8[2048]{0}', space=vmem, size = 0x800, scoped, tag = 'output window, operand 0, single buffered']
    #allocation8 [shape = 'u8[2048]{0}', space=vmem, size = 0x800, scoped, tag = 'output window, operand 1, single buffered']
    #allocation9 [shape = 's32[1]{0}', space=sflag, size = 0x4, scoped, tag = 'scoped memory for tpu_custom_call.1']
    %9 = vsyncpa [#allocation3], 0
    %10 = vsyncpa [#allocation6], 0
    %11 = vsyncpa [#allocation4], 0
    %12 = vsyncpa [#allocation9], 0
    // Predicated region
    $region2: #{tpu_custom_call.1} parent=1 // pred_check
      _
    $region3: #{tpu_custom_call.1} parent=1 // pred_check_branch
      %14 = sbr.rel (0) target = $region5
    $region4: #{tpu_custom_call.1} parent=1 // pred_region
      %16 = vsyncadd [#allocation3], 0
      %s18 = sshll.u32 %s0, 4
      %s19 = int_to_ptr.hbm [resolvable:$true] %s18
      %s20 = sshll.u32 [#allocation2], 4
      %s21 = int_to_ptr.vmem [resolvable:$true] %s20
      %23 = dma.hbm_to_vmem [thread:$0]  %s19, 256, %s21, [#allocation3]
    $region5: #{tpu_custom_call.1} parent=1 // pred_fallthru
      _
    // Predicated region
    $region6: #{tpu_custom_call.1} parent=1 // pred_check
      _
    $region7: #{tpu_custom_call.1} parent=1 // pred_check_branch
      %25 = sbr.rel (0) target = $region9
    $region8: #{tpu_custom_call.1} parent=1 // pred_region
      %27 = vsyncadd [#allocation6], 0
      %s29 = sshll.u32 %s1, 4
      %s30 = int_to_ptr.hbm [resolvable:$true] %s29
      %s31 = sshll.u32 [#allocation5], 4
      %s32 = int_to_ptr.vmem [resolvable:$true] %s31
      %34 = dma.hbm_to_vmem [thread:$0]  %s30, 256, %s32, [#allocation6]
    $region9: #{tpu_custom_call.1} parent=1 // pred_fallthru
      _
    // Predicated region
    $region10: #{tpu_custom_call.1} parent=1 // pred_check
      _
    $region11: #{tpu_custom_call.1} parent=1 // pred_check_branch
      %36 = sbr.rel (0) target = $region13
    $region12: #{tpu_custom_call.1} parent=1 // pred_region
      %38 = dma.done [#allocation3], 256
    $region13: #{tpu_custom_call.1} parent=1 // pred_fallthru
      _
    // Predicated region
    $region14: #{tpu_custom_call.1} parent=1 // pred_check
      _
    $region15: #{tpu_custom_call.1} parent=1 // pred_check_branch
      %40 = sbr.rel (0) target = $region17
    $region16: #{tpu_custom_call.1} parent=1 // pred_region
      %42 = dma.done [#allocation6], 256
    $region17: #{tpu_custom_call.1} parent=1 // pred_fallthru
      _
    %v43 = vld [vmem:[#allocation2] ss:$4 sm:$0xf]
    %v44 = vld [vmem:[#allocation5] ss:$4 sm:$0xf]
    %v45 = vmul.f32 %v43, %v43
    %v46 = vmul.f32 %v44, %v44
    %v47 = vadd.f32 %v45, %v46
    %s48 = scalar_lea.vmem [#allocation2], 1
    %v49 = vld [vmem:[%s48] ss:$4 sm:$0xf]
    %s50 = scalar_lea.vmem [#allocation5], 1
    %v51 = vld [vmem:[%s50] ss:$4 sm:$0xf]
    %v52 = vmul.f32 %v49, %v49
    %v53 = vmul.f32 %v51, %v51
    %v54 = vadd.f32 %v52, %v53
    %vm55 = vcmp.gt.f32.partialorder %v54, %v47
    %v56 = vsel %vm55, %v49, %v43
    %v57 = vsel %vm55, %v51, %v44
    %v58 = vsel %vm55, %v54, %v47
    %s59 = scalar_lea.vmem [#allocation2], 2
    %v60 = vld [vmem:[%s59] ss:$4 sm:$0xf]
    %s61 = scalar_lea.vmem [#allocation5], 2
    %v62 = vld [vmem:[%s61] ss:$4 sm:$0xf]
    %v63 = vmul.f32 %v60, %v60
    %v64 = vmul.f32 %v62, %v62
    %v65 = vadd.f32 %v63, %v64
    %vm66 = vcmp.gt.f32.partialorder %v65, %v58
    %v67 = vsel %vm66, %v60, %v56
    %v68 = vsel %vm66, %v62, %v57
    %v69 = vsel %vm66, %v65, %v58
    %s70 = scalar_lea.vmem [#allocation2], 3
    %v71 = vld [vmem:[%s70] ss:$4 sm:$0xf]
    %s72 = scalar_lea.vmem [#allocation5], 3
    %v73 = vld [vmem:[%s72] ss:$4 sm:$0xf]
    %v74 = vmul.f32 %v71, %v71
    %v75 = vmul.f32 %v73, %v73
    %v76 = vadd.f32 %v74, %v75
    %vm77 = vcmp.gt.f32.partialorder %v76, %v69
    %v78 = vsel %vm77, %v71, %v67
    %v79 = vsel %vm77, %v73, %v68
    %v80 = vlaneseq
    %vm81 = vcmp.ge.s32.totalorder %v80, 0
    %vm82 = vcmp.lt.s32.totalorder %v80, 512
    %vm83 = vmand %vm81, %vm82
    %84 = vst.msk [vmem:[#allocation7] sm:$0xf] %vm83, %v78
    %85 = vst.msk [vmem:[#allocation8] sm:$0xf] %vm83, %v79
    // Predicated region
    $region18: #{tpu_custom_call.1} parent=1 // pred_check
      _
    $region19: #{tpu_custom_call.1} parent=1 // pred_check_branch
      %87 = sbr.rel (0) target = $region21
    $region20: #{tpu_custom_call.1} parent=1 // pred_region
      %89 = vsyncadd [#allocation4], 0
      %s91 = sshll.u32 [#allocation7], 4
      %s92 = int_to_ptr.vmem [resolvable:$true] %s91
      %s93 = sshll.u32 %s2, 4
      %s94 = int_to_ptr.hbm [resolvable:$true] %s93
      %96 = dma.vmem_to_hbm [thread:$0]  %s92, 64, %s94, [#allocation4]
    $region21: #{tpu_custom_call.1} parent=1 // pred_fallthru
      _
    // Predicated region
    $region22: #{tpu_custom_call.1} parent=1 // pred_check
      _
    $region23: #{tpu_custom_call.1} parent=1 // pred_check_branch
      %98 = sbr.rel (0) target = $region25
    $region24: #{tpu_custom_call.1} parent=1 // pred_region
      %100 = vsyncadd [#allocation9], 0
      %s102 = sshll.u32 [#allocation8], 4
      %s103 = int_to_ptr.vmem [resolvable:$true] %s102
      %s104 = sshll.u32 %s3, 4
      %s105 = int_to_ptr.hbm [resolvable:$true] %s104
      %107 = dma.vmem_to_hbm [thread:$0]  %s103, 64, %s105, [#allocation9]
    $region25: #{tpu_custom_call.1} parent=1 // pred_fallthru
      _
    // Predicated region
    $region26: #{tpu_custom_call.1} parent=1 // pred_check
      _
    $region27: #{tpu_custom_call.1} parent=1 // pred_check_branch
      %109 = sbr.rel (0) target = $region29
    $region28: #{tpu_custom_call.1} parent=1 // pred_region
      %111 = dma.done [#allocation4], 64
    $region29: #{tpu_custom_call.1} parent=1 // pred_fallthru
      _
    // Predicated region
    $region30: #{tpu_custom_call.1} parent=1 // pred_check
      _
    $region31: #{tpu_custom_call.1} parent=1 // pred_check_branch
      %113 = sbr.rel (0) target = $region33
    $region32: #{tpu_custom_call.1} parent=1 // pred_region
      %115 = dma.done [#allocation9], 64
    $region33: #{tpu_custom_call.1} parent=1 // pred_fallthru
      _
    %116 = vsyncpa [#allocation3], 1
    %117 = vsyncpa [#allocation6], 1
    %118 = vsyncpa [#allocation4], 1
    %119 = vsyncpa [#allocation9], 1

</llo_original>
